<compile_context>
chip_gen: v5e
topology: v5e:2x2
jax: 0.10.0
libtpu: 0.0.40
codegen_flags: <defaults>
</compile_context>

<pallas_src>
import functools

import jax
import jax.numpy as jnp
from jax import lax
from jax.experimental import pallas as pl
from jax.experimental.pallas import tpu as pltpu

NUM_STATE = 2      # MountainCar-v0 observation dim
NUM_ACTION = 3     # MountainCar-v0 action dim
HIDDEN = 128
_HEAD_COLS = NUM_ACTION + 1   # [action logits | value]


def acer_forward_kernel(p1_ref, p23_ref, x_ref, n_ref, out_ref):
    """Single grid point; everything resident in VMEM.

    p1_ref : (4, 128)   VMEM  rows 0..1 fc1 W, row 2 fc1 b, row 3 fused head bias
    p23_ref: (128, 128) VMEM  [w_action | w_value | zeros] (lane-padded)
    x_ref  : (B_pad, 2) VMEM  zero-padded batch of states
    n_ref  : (1,)       SMEM  number of valid (un-padded) rows
    out_ref: (B_pad, 128) VMEM lane-dense slab: cols 0..2 = probs, col 3 = value
    """
    x = x_ref[...]                                            # (B_pad, 2) f32

    # fc1 (K=2 contraction) on the VPU: two broadcast FMAs + bias, then ReLU.
    h = (x[:, 0:1] * p1_ref[0:1, :]
         + x[:, 1:2] * p1_ref[1:2, :]
         + p1_ref[2:3, :])                                    # (B_pad, 128)
    h = jnp.maximum(h, 0.0)

    # Fused action + value heads: one lane-dense MXU matmul + fused bias row.
    head = jnp.dot(h, p23_ref[...], preferred_element_type=jnp.float32)
    head = head + p1_ref[3:4, :]                              # (B_pad, 128)

    # Softmax over dim=0 (batch axis), per column, excluding padded rows.
    valid = n_ref[0]
    rows = lax.broadcasted_iota(jnp.int32, head.shape, 0)
    cols = lax.broadcasted_iota(jnp.int32, head.shape, 1)
    masked = jnp.where(rows < valid, head, jnp.float32(-1e30))
    m = jnp.max(masked, axis=0, keepdims=True)                # (1, 128)
    e = jnp.exp(masked - m)
    inv = 1.0 / jnp.sum(e, axis=0, keepdims=True)             # exact recip, (1,128)
    probs = e * inv

    # Columns 0..2 get the softmaxed probabilities; col 3 (value) and the zero
    # padding columns pass through raw.  One unmasked full-tile store.
    out_ref[...] = jnp.where(cols < NUM_ACTION, probs, head)


def pack_params(w1, b1, w2, b2, w3, b3):
    """Pack 7 small parameter arrays into 2 tile-exact lane-dense arrays."""
    b23 = jnp.concatenate([b2, b3], axis=1)                   # (1, 4)
    b23 = jnp.pad(b23, ((0, 0), (0, HIDDEN - _HEAD_COLS)))    # (1, 128)
    p1 = jnp.concatenate([w1, b1, b23], axis=0)               # (4, 128)

    w23 = jnp.concatenate([w2, w3], axis=1)                   # (128, 4)
    p23 = jnp.pad(w23, ((0, 0), (0, HIDDEN - _HEAD_COLS)))    # (128, 128)
    return p1, p23


@jax.jit
def _acer_forward_padded(p1, p23, x_pad, n):
    """Shape-stable core: one compile per B_pad bucket, n is runtime data."""
    vmem = pl.BlockSpec(memory_space=pltpu.MemorySpace.VMEM)
    smem = pl.BlockSpec(memory_space=pltpu.MemorySpace.SMEM)
    return pl.pallas_call(
        acer_forward_kernel,
        out_shape=jax.ShapeDtypeStruct((x_pad.shape[0], HIDDEN), jnp.float32),
        in_specs=[vmem, vmem, vmem, smem],
        out_specs=vmem,
    )(p1, p23, x_pad, n)


def acer_forward(x, w1, b1, w2, b2, w3, b3):
    B = x.shape[0]
    B_pad = max(8, ((B + 7) // 8) * 8)                        # sublane-aligned bucket
    x_pad = jnp.pad(x.astype(jnp.float32), ((0, B_pad - B), (0, 0)))
    p1, p23 = pack_params(w1, b1, w2, b2, w3, b3)
    n = jnp.array([B], dtype=jnp.int32)                       # runtime scalar -> SMEM

    out = _acer_forward_padded(p1, p23, x_pad, n)

    probs = out[:B, :NUM_ACTION]                              # (B, 3)
    value = out[:B, NUM_ACTION:NUM_ACTION + 1]                # (B, 1)
    return probs, value


def init_params(key):
    """Deterministic synthetic parameters (PyTorch-Linear-style uniform init)."""
    ks = jax.random.split(key, 6)

    def linear(kw, kb, fan_in, fan_out):
        bound = 1.0 / jnp.sqrt(fan_in)
        w = jax.random.uniform(kw, (fan_in, fan_out), jnp.float32, -bound, bound)
        b = jax.random.uniform(kb, (1, fan_out), jnp.float32, -bound, bound)
        return w, b

    w1, b1 = linear(ks[0], ks[1], NUM_STATE, HIDDEN)
    w2, b2 = linear(ks[2], ks[3], HIDDEN, NUM_ACTION)
    w3, b3 = linear(ks[4], ks[5], HIDDEN, 1)
    return w1, b1, w2, b2, w3, b3


def reference_forward(x, w1, b1, w2, b2, w3, b3):
    h = jnp.maximum(x @ w1 + b1, 0.0)
    logits = h @ w2 + b2
    probs = jax.nn.softmax(logits, axis=0)   # dim=0, as in the PyTorch code
    value = h @ w3 + b3
    return probs, value


if __name__ == "__main__":
    key = jax.random.PRNGKey(0)
    k_x, k_p = jax.random.split(key)
    params = init_params(k_p)

    B = 4  # small batch of MountainCar states
    x = jax.random.normal(k_x, (B, NUM_STATE), dtype=jnp.float32)

    probs, value = acer_forward(x, *params)
    jax.block_until_ready((probs, value))

    ref_probs, ref_value = reference_forward(x, *params)
    assert probs.shape == (B, NUM_ACTION) and value.shape == (B, 1)
    assert jnp.allclose(probs, ref_probs, atol=1e-5, rtol=1e-5)
    assert jnp.allclose(value, ref_value, atol=1e-5, rtol=1e-5)

    # A different batch size in the same 8-row bucket reuses the SAME compiled
    # kernel (valid_rows is a runtime SMEM scalar, not baked into the binary).
    B2 = 6
    x2 = jax.random.normal(jax.random.PRNGKey(1), (B2, NUM_STATE), jnp.float32)
    probs2, value2 = acer_forward(x2, *params)
    jax.block_until_ready((probs2, value2))
    ref_probs2, ref_value2 = reference_forward(x2, *params)
    assert jnp.allclose(probs2, ref_probs2, atol=1e-5, rtol=1e-5)
    assert jnp.allclose(value2, ref_value2, atol=1e-5, rtol=1e-5)

    print("KERNEL_OK")
</pallas_src>

<mosaic_0001>
module attributes {stable_mosaic.version = 11 : i64} {
  func.func @acer_forward_kernel(%arg0: memref<4x128xf32, #tpu.memory_space<vmem>>, %arg1: memref<128x128xf32, #tpu.memory_space<vmem>>, %arg2: memref<8x2xf32, #tpu.memory_space<vmem>>, %arg3: memref<1xi32, #tpu.memory_space<smem>>, %arg4: memref<8x128xf32, #tpu.memory_space<vmem>>) attributes {dimension_semantics = [], scalar_prefetch = 0 : i64, scratch_operands = 0 : i64, tpu.core_type = #tpu.core_type<tc>} {
    %c0 = arith.constant 0 : index
    %c0_0 = arith.constant 0 : index
    %0 = vector.load %arg2[%c0, %c0_0] : memref<8x2xf32, #tpu.memory_space<vmem>>, vector<8x2xf32>
    %1 = vector.extract_strided_slice %0 {offsets = [0, 0], sizes = [8, 1], strides = [1, 1]} : vector<8x2xf32> to vector<8x1xf32>
    %c0_1 = arith.constant 0 : index
    %c0_2 = arith.constant 0 : index
    %2 = vector.load %arg0[%c0_1, %c0_2] : memref<4x128xf32, #tpu.memory_space<vmem>>, vector<1x128xf32>
    %3 = vector.broadcast %1 : vector<8x1xf32> to vector<8x128xf32>
    %4 = vector.broadcast %2 : vector<1x128xf32> to vector<8x128xf32>
    %5 = arith.mulf %3, %4 : vector<8x128xf32>
    %6 = vector.extract_strided_slice %0 {offsets = [0, 1], sizes = [8, 1], strides = [1, 1]} : vector<8x2xf32> to vector<8x1xf32>
    %c1 = arith.constant 1 : index
    %c0_3 = arith.constant 0 : index
    %7 = vector.load %arg0[%c1, %c0_3] : memref<4x128xf32, #tpu.memory_space<vmem>>, vector<1x128xf32>
    %8 = vector.broadcast %6 : vector<8x1xf32> to vector<8x128xf32>
    %9 = vector.broadcast %7 : vector<1x128xf32> to vector<8x128xf32>
    %10 = arith.mulf %8, %9 : vector<8x128xf32>
    %11 = arith.addf %5, %10 : vector<8x128xf32>
    %c2 = arith.constant 2 : index
    %c0_4 = arith.constant 0 : index
    %12 = vector.load %arg0[%c2, %c0_4] : memref<4x128xf32, #tpu.memory_space<vmem>>, vector<1x128xf32>
    %13 = vector.broadcast %12 : vector<1x128xf32> to vector<8x128xf32>
    %14 = arith.addf %11, %13 : vector<8x128xf32>
    %cst = arith.constant 0.000000e+00 : f32
    %15 = vector.broadcast %cst : f32 to vector<8x128xf32>
    %16 = arith.maximumf %14, %15 : vector<8x128xf32>
    %c0_5 = arith.constant 0 : index
    %c0_6 = arith.constant 0 : index
    %17 = vector.load %arg1[%c0_5, %c0_6] : memref<128x128xf32, #tpu.memory_space<vmem>>, vector<128x128xf32>
    %cst_7 = arith.constant dense<0.000000e+00> : vector<8x128xf32>
    %18 = tpu.matmul %16, %17, %cst_7 {dimension_numbers = #tpu.dot_dimension_numbers<[1], [0], [0], [1], [0, 0, 1, 1], [], []>} : vector<8x128xf32>, vector<128x128xf32>, vector<8x128xf32> -> vector<8x128xf32>
    %c3 = arith.constant 3 : index
    %c0_8 = arith.constant 0 : index
    %19 = vector.load %arg0[%c3, %c0_8] : memref<4x128xf32, #tpu.memory_space<vmem>>, vector<1x128xf32>
    %20 = vector.broadcast %19 : vector<1x128xf32> to vector<8x128xf32>
    %21 = arith.addf %18, %20 : vector<8x128xf32>
    %c0_9 = arith.constant 0 : index
    %22 = memref.load %arg3[%c0_9] : memref<1xi32, #tpu.memory_space<smem>>
    %23 = tpu.iota {dimensions = array<i32: 0>} : vector<8x128xi32>
    %24 = tpu.iota {dimensions = array<i32: 1>} : vector<8x128xi32>
    %25 = vector.broadcast %22 : i32 to vector<8x128xi32>
    %26 = arith.cmpi slt, %23, %25 : vector<8x128xi32>
    %cst_10 = arith.constant -1.000000e+30 : f32
    %27 = vector.broadcast %cst_10 : f32 to vector<8x128xf32>
    %28 = arith.select %26, %21, %27 : vector<8x128xi1>, vector<8x128xf32>
    %cst_11 = arith.constant dense<0xFF800000> : vector<128xf32>
    %29 = vector.multi_reduction <maximumf>, %28, %cst_11 [0] : vector<8x128xf32> to vector<128xf32>
    %30 = vector.shape_cast %29 : vector<128xf32> to vector<1x128xf32>
    %31 = vector.broadcast %30 : vector<1x128xf32> to vector<8x128xf32>
    %32 = arith.subf %28, %31 : vector<8x128xf32>
    %33 = math.exp %32 : vector<8x128xf32>
    %cst_12 = arith.constant dense<0.000000e+00> : vector<128xf32>
    %34 = vector.multi_reduction <add>, %33, %cst_12 [0] : vector<8x128xf32> to vector<128xf32>
    %35 = vector.shape_cast %34 : vector<128xf32> to vector<1x128xf32>
    %cst_13 = arith.constant 1.000000e+00 : f32
    %36 = vector.broadcast %cst_13 : f32 to vector<1x128xf32>
    %37 = arith.divf %36, %35 : vector<1x128xf32>
    %38 = vector.broadcast %37 : vector<1x128xf32> to vector<8x128xf32>
    %39 = arith.mulf %33, %38 : vector<8x128xf32>
    %c3_i32 = arith.constant 3 : i32
    %40 = vector.broadcast %c3_i32 : i32 to vector<8x128xi32>
    %41 = arith.cmpi slt, %24, %40 : vector<8x128xi32>
    %42 = arith.select %41, %39, %21 : vector<8x128xi1>, vector<8x128xf32>
    %c0_14 = arith.constant 0 : index
    %c0_15 = arith.constant 0 : index
    %43 = vector.load %arg4[%c0_14, %c0_15] : memref<8x128xf32, #tpu.memory_space<vmem>>, vector<8x128xf32>
    tpu.vector_store %arg4[%c0_14, %c0_15], %42 {strides = array<i32>} : memref<8x128xf32, #tpu.memory_space<vmem>>, vector<8x128xf32>,
    return
  }
}

</mosaic_0001>

<llo_original>
// kernel: _acer_forward_padded.1
$region0: #{_acer_forward_padded.1}
  #allocation0 [shape = 'u32[]', space=smem, size = 0x4, offset = 0x4, fixed_abs, tag = 'smem constant byte address 0x4 - core index']
  #allocation1 [shape = 'u32[72,128]{1,0:T(1,128)}', space=vmem, size = 0x9000, scoped, tag = 'internal scratch']
  #allocation2 [shape = 's32[1]{0:T(128)S(6)}', space=smem, size = 0x200, scoped, tag = 'scoped memory for _acer_forward_padded.1']
  %s0 = inlined_call_operand.vmem [shape: f32[4,128], index: 0, kind: input, shape index: {}]
  %s1 = inlined_call_operand.hbm [shape: f32[128,128], index: 1, kind: input, shape index: {}]
  %s2 = inlined_call_operand.vmem [shape: f32[8,2], index: 2, kind: input, shape index: {}]
  %s3 = inlined_call_operand.<no memory space> [shape: s32[1], index: 3, kind: input, shape index: {}]
  %s4 = inlined_call_operand.hbm [shape: f32[8,128], index: 4, kind: output, shape index: {}]
  %s5 = sld [smem:[#allocation0]]
  $region30: #{_acer_forward_padded.1} parent=0
    _
  %s7 = ssub.s32 1, %s5
  %s8 = scalar_select 0, %s7, %s5
  %9 = sst [smem:[#allocation2]] %s3
  $region1: #{_acer_forward_padded.1} parent=0
    #allocation3 [shape = 'u8[65536]{0}', space=vmem, size = 0x10000, scoped, tag = 'input window, operand 1, single buffered']
    #allocation4 [shape = 's32[1]{0}', space=sflag, size = 0x4, scoped, tag = 'scoped memory for _acer_forward_padded.1']
    #allocation5 [shape = 's32[1]{0}', space=sflag, size = 0x4, scoped, tag = 'scoped memory for _acer_forward_padded.1']
    #allocation6 [shape = 'u8[4096]{0}', space=vmem, size = 0x1000, scoped, tag = 'output window, operand 0, single buffered']
    %10 = vsyncpa [#allocation4], 0
    %11 = vsyncpa [#allocation5], 0
    // Predicated region
    $region2: #{_acer_forward_padded.1} parent=1 // pred_check
      _
    $region3: #{_acer_forward_padded.1} parent=1 // pred_check_branch
      %13 = sbr.rel (0) target = $region5
    $region4: #{_acer_forward_padded.1} parent=1 // pred_region
      _
    $region5: #{_acer_forward_padded.1} parent=1 // pred_fallthru
      _
    // Predicated region
    $region6: #{_acer_forward_padded.1} parent=1 // pred_check
      _
    $region7: #{_acer_forward_padded.1} parent=1 // pred_check_branch
      %15 = sbr.rel (0) target = $region9
    $region8: #{_acer_forward_padded.1} parent=1 // pred_region
      %17 = vsyncadd [#allocation4], 0
      %s18 = sshll.u32 %s1, 4
      %s19 = int_to_ptr.hbm [resolvable:$true] %s18
      %s20 = sshll.u32 [#allocation3], 4
      %s21 = int_to_ptr.vmem [resolvable:$true] %s20
      %26 = dma.hbm_to_vmem [thread:$0]  %s19, 2048, %s21, [#allocation4], 128, 128, 8
    $region9: #{_acer_forward_padded.1} parent=1 // pred_fallthru
      _
    // Predicated region
    $region10: #{_acer_forward_padded.1} parent=1 // pred_check
      _
    $region11: #{_acer_forward_padded.1} parent=1 // pred_check_branch
      %28 = sbr.rel (0) target = $region13
    $region12: #{_acer_forward_padded.1} parent=1 // pred_region
      _
    $region13: #{_acer_forward_padded.1} parent=1 // pred_fallthru
      _
    // Predicated region
    $region14: #{_acer_forward_padded.1} parent=1 // pred_check
      _
    $region15: #{_acer_forward_padded.1} parent=1 // pred_check_branch
      %30 = sbr.rel (0) target = $region17
    $region16: #{_acer_forward_padded.1} parent=1 // pred_region
      _
    $region17: #{_acer_forward_padded.1} parent=1 // pred_fallthru
      _
    // Predicated region
    $region18: #{_acer_forward_padded.1} parent=1 // pred_check
      _
    $region19: #{_acer_forward_padded.1} parent=1 // pred_check_branch
      %32 = sbr.rel (0) target = $region21
    $region20: #{_acer_forward_padded.1} parent=1 // pred_region
      %34 = dma.done [#allocation4], 2048
    $region21: #{_acer_forward_padded.1} parent=1 // pred_fallthru
      _
    %v35 = vld [vmem:[%s2] sm:$0xff]
    %v36 = vld [vmem:[%s0] sm:$0x1]
    %38 = vset.pattern.permute.xlu0 0
    %39 = vperm.xlu0 %38, %v35
    %v40 = vpop.permute.xlu0 %39
    %v42 = vperm.slane %v36, 0
    %v43 = vmul.f32 %v40, %v42
    %v44 = vld [vmem:[%s0 + $0x1] sm:$0x1]
    %45 = vset.pattern.permute.xlu0 1
    %46 = vperm.xlu0 %45, %v35
    %v47 = vpop.permute.xlu0 %46
    %v49 = vperm.slane %v44, 0
    %v50 = vmul.f32 %v47, %v49
    %v51 = vadd.f32 %v43, %v50
    %v52 = vld [vmem:[%s0 + $0x2] sm:$0x1]
    %v53 = vperm.slane %v52, 0
    %v54 = vadd.f32 %v51, %v53
    %v55 = vmax.f32 %v54, 0.0
    %v56 = vld [vmem:[#allocation3] sm:$0xff]
    %v57 = vld [vmem:[#allocation3 + $0x8] sm:$0xff]
    %v58 = vld [vmem:[#allocation3 + $0x10] sm:$0xff]
    %v59 = vld [vmem:[#allocation3 + $0x18] sm:$0xff]
    %v60 = vld [vmem:[#allocation3 + $0x20] sm:$0xff]
    %v61 = vld [vmem:[#allocation3 + $0x28] sm:$0xff]
    %v62 = vld [vmem:[#allocation3 + $0x30] sm:$0xff]
    %v63 = vld [vmem:[#allocation3 + $0x38] sm:$0xff]
    %v64 = vld [vmem:[#allocation3 + $0x40] sm:$0xff]
    %v65 = vld [vmem:[#allocation3 + $0x48] sm:$0xff]
    %v66 = vld [vmem:[#allocation3 + $0x50] sm:$0xff]
    %v67 = vld [vmem:[#allocation3 + $0x58] sm:$0xff]
    %v68 = vld [vmem:[#allocation3 + $0x60] sm:$0xff]
    %v69 = vld [vmem:[#allocation3 + $0x68] sm:$0xff]
    %v70 = vld [vmem:[#allocation3 + $0x70] sm:$0xff]
    %v71 = vld [vmem:[#allocation3 + $0x78] sm:$0xff]
    %v72 = vld [vmem:[%s0 + $0x3] sm:$0x1]
    %v73 = vperm.slane %v72, 0
    %74 = vmatpush.msra.mxu0 %v71
    %75 = vmatpush.msra.mxu0 %v70
    %76 = vmatpush.msra.mxu0 %v69
    %77 = vmatpush.msra.mxu0 %v68
    %78 = vmatpush.msra.mxu0 %v67
    %79 = vmatpush.msra.mxu0 %v66
    %80 = vmatpush.msra.mxu0 %v65
    %81 = vmatpush.msra.mxu0 %v64
    %82 = vmatpush.msra.mxu0 %v63
    %83 = vmatpush.msra.mxu0 %v62
    %84 = vmatpush.msra.mxu0 %v61
    %85 = vmatpush.msra.mxu0 %v60
    %86 = vmatpush.msra.mxu0 %v59
    %87 = vmatpush.msra.mxu0 %v58
    %88 = vmatpush.msra.mxu0 %v57
    %89 = vmatpush.msra.mxu0 %v56
    %90 = vmatmul.f32.gmra.mxu0 %v55
    %v91 = vpop.f32.mrf.mxu0
    %v92 = vadd.f32 %v73, %v91
    %93 = vdwg.mxu0
    %s94 = sld [smem:[#allocation2]]
    %v95 = vlaneseq
    %v96 = vshrl.u32 %v95, 7
    %v97 = vlaneseq
    %v98 = vand.u32 %v97, 127
    %v99 = vstv %s94
    %vm100 = vcmp.lt.s32.totalorder %v96, %v99
    %v101 = vsel %vm100, %v92, -1e+30
    %v102 = vrot.slane %v101, 4
    %v103 = vmax.f32 %v101, %v102
    %v104 = vrot.slane %v103, 2
    %v105 = vmax.f32 %v103, %v104
    %v106 = vrot.slane %v105, 1
    %v107 = vmax.f32 %v105, %v106
    %v108 = vsub.f32 %v101, %v107
    %v109 = vmul.f32 %v108, 1.442695
    %v110 = vpow.pop %v109
    %v111 = vrot.slane %v110, 4
    %v112 = vadd.f32 %v110, %v111
    %v113 = vrot.slane %v112, 2
    %v114 = vadd.f32 %v112, %v113
    %v115 = vrot.slane %v114, 1
    %v116 = vadd.f32 %v114, %v115
    %v117 = vrcp.pop %v116
    %v118 = vmul.f32 %v116, %v117
    %v119 = vsub.f32 1.0, %v118
    %v120 = vmul.f32 %v117, %v119
    %v121 = vadd.f32 %v117, %v120
    %vm122 = vweird.f32 %v116
    %vm123 = vweird.f32 %v117
    %vm124 = vmor %vm122, %vm123
    %v125 = vsel %vm124, %v117, %v121
    %v126 = vand.u32 2147483647, %v116
    %vm127 = vcmp.eq.f32.partialorder %v126, 8.507059e+37
    %v128 = vand.u32 %v116, 2147483648
    %v129 = vor.u32 1.1754944e-38, %v128
    %v130 = vsel %vm127, %v129, %v125
    %v131 = vmul.f32 1.0, %v130
    %v132 = vmul.f32 %v110, %v131
    %vm133 = vcmp.lt.s32.totalorder %v98, 3
    %v134 = vsel %vm133, %v132, %v92
    %135 = vst [vmem:[#allocation6] sm:$0xff] %v134
    // Predicated region
    $region22: #{_acer_forward_padded.1} parent=1 // pred_check
      _
    $region23: #{_acer_forward_padded.1} parent=1 // pred_check_branch
      %137 = sbr.rel (0) target = $region25
    $region24: #{_acer_forward_padded.1} parent=1 // pred_region
      %139 = vsyncadd [#allocation5], 0
      %s141 = sshll.u32 [#allocation6], 4
      %s142 = int_to_ptr.vmem [resolvable:$true] %s141
      %s143 = sshll.u32 %s4, 4
      %s144 = int_to_ptr.hbm [resolvable:$true] %s143
      %146 = dma.vmem_to_hbm [thread:$0]  %s142, 128, %s144, [#allocation5]
    $region25: #{_acer_forward_padded.1} parent=1 // pred_fallthru
      _
    // Predicated region
    $region26: #{_acer_forward_padded.1} parent=1 // pred_check
      _
    $region27: #{_acer_forward_padded.1} parent=1 // pred_check_branch
      %148 = sbr.rel (0) target = $region29
    $region28: #{_acer_forward_padded.1} parent=1 // pred_region
      %150 = dma.done [#allocation5], 128
    $region29: #{_acer_forward_padded.1} parent=1 // pred_fallthru
      _
    %151 = vsyncpa [#allocation4], 1
    %152 = vsyncpa [#allocation5], 1

</llo_original>
